<compile_context>
chip_gen: v5e
topology: v5e:2x2
jax: 0.10.0
libtpu: 0.0.40
codegen_flags: <defaults>
</compile_context>

<pallas_src>
import functools

import jax
import jax.numpy as jnp
from jax import lax
from jax.experimental import pallas as pl
from jax.experimental.pallas import tpu as pltpu


# ----------------------------------------------------------------------------
# Kernel: one batch tile, fused actor+critic branches + value head.
# ----------------------------------------------------------------------------
def mlp_base_kernel(x_ref, w1_ref, w2_ref, bias_ref, out_ref, *, hidden_size):
    H = hidden_size
    x = x_ref[...]                                   # (TB, I)

    b1 = bias_ref[0:1, :]                            # (1, 2H)  [ba1 | bc1]
    b2 = bias_ref[1:2, :]                            # (1, 2H)  [ba2 | bc2]
    vhead = bias_ref[2:3, :]                         # (1, 2H)  [0    | Wcl]
    bcl = bias_ref[3:4, 0:1]                         # (1, 1)   critic head bias

    # Layer 1 (fused actor|critic): one MXU matmul, cols [0,H)=actor, [H,2H)=critic.
    h1 = jnp.tanh(
        jnp.dot(x, w1_ref[...], preferred_element_type=jnp.float32) + b1)
    # Layer 2 (block-diagonal fused weight): one MXU matmul for both branches.
    h2 = jnp.tanh(
        jnp.dot(h1, w2_ref[...], preferred_element_type=jnp.float32) + b2)

    # Critic head on VPU + lane reduce: actor lanes of vhead are zero, so this
    # is exactly hidden_critic @ Wcl without touching the MXU.
    value = jnp.sum(h2 * vhead, axis=-1, keepdims=True) + bcl   # (TB, 1)

    # Lane-dense combined output: cols [0,H) = hidden_actor, cols [H,2H) = value
    # (broadcast). Full-width unmasked stores; wrapper slices the views.
    lane = lax.broadcasted_iota(jnp.int32, h2.shape, dimension=1)
    out_ref[...] = jnp.where(lane < H, h2, value)


# ----------------------------------------------------------------------------
# Wrapper: batch-gridded pallas_call.
# ----------------------------------------------------------------------------
def mlp_base_forward(inputs, rnn_hxs, masks, packed, *, hidden_size):
    """Pallas-backed MLPBase.forward (recurrent=False)."""
    del masks  # only used on the recurrent path
    # TODO(synk): recurrent GRU path (_forward_gru) not implemented; this is
    # the recurrent=False configuration, where rnn_hxs passes through untouched.
    B, I = inputs.shape
    H = hidden_size
    W = 2 * H

    # Batch tile: multiple of 8 (f32 sublane); cap so (x + hidden tiles) x2
    # double-buffering stays tiny even under v7x's 64 MiB VMEM.
    TB = min(256, ((B + 7) // 8) * 8)
    Bp = pl.cdiv(B, TB) * TB
    x = inputs if Bp == B else jnp.pad(inputs, ((0, Bp - B), (0, 0)))

    flops = 2 * Bp * (I * W + W * W + W)
    bytes_accessed = 4 * (Bp * I + I * W + W * W + 4 * W + Bp * W)

    out = pl.pallas_call(
        functools.partial(mlp_base_kernel, hidden_size=H),
        out_shape=jax.ShapeDtypeStruct((Bp, W), jnp.float32),
        grid=(Bp // TB,),
        in_specs=[
            pl.BlockSpec((TB, I), lambda i: (i, 0)),     # x: tiled over batch
            pl.BlockSpec((I, W), lambda i: (0, 0)),      # fused W1 (resident)
            pl.BlockSpec((W, W), lambda i: (0, 0)),      # block-diag W2 (resident)
            pl.BlockSpec((4, W), lambda i: (0, 0)),      # packed biases + value head
        ],
        out_specs=pl.BlockSpec((TB, W), lambda i: (i, 0)),
        compiler_params=pltpu.CompilerParams(
            dimension_semantics=("parallel",)),
        cost_estimate=pl.CostEstimate(
            flops=flops,
            transcendentals=Bp * 2 * W,        # tanh count
            bytes_accessed=bytes_accessed),
    )(x, packed["w1"], packed["w2"], packed["bias"])

    hidden_actor = out[:B, :H]
    value = out[:B, H:H + 1]
    return value, hidden_actor, rnn_hxs


# ----------------------------------------------------------------------------
# Parameter init (orthogonal, gain=sqrt(2), zero bias) + packing.
# ----------------------------------------------------------------------------
def orthogonal_(key, out_features, in_features, gain):
    a = jax.random.normal(key, (out_features, in_features), jnp.float32)
    transposed = out_features < in_features
    if transposed:
        a = a.T
    q, r = jnp.linalg.qr(a)
    q = q * jnp.sign(jnp.diag(r))
    if transposed:
        q = q.T
    return gain * q  # (out_features, in_features), like torch Linear.weight


def init_mlp_base_params(key, num_inputs, hidden_size):
    gain = jnp.sqrt(2.0)
    keys = jax.random.split(key, 5)
    H = hidden_size
    # stored as (in, out) so the kernel computes x @ W
    return {
        "wa1": orthogonal_(keys[0], H, num_inputs, gain).T,
        "wa2": orthogonal_(keys[1], H, H, gain).T,
        "wc1": orthogonal_(keys[2], H, num_inputs, gain).T,
        "wc2": orthogonal_(keys[3], H, H, gain).T,
        "wcl": orthogonal_(keys[4], 1, H, gain).T,          # (H, 1)
        "ba1": jnp.zeros((H,), jnp.float32),
        "ba2": jnp.zeros((H,), jnp.float32),
        "bc1": jnp.zeros((H,), jnp.float32),
        "bc2": jnp.zeros((H,), jnp.float32),
        "bcl": jnp.zeros((1,), jnp.float32),
    }


def pack_params(p, hidden_size):
    """Fuse actor/critic weights and pack biases for the kernel."""
    H = hidden_size
    w1 = jnp.concatenate([p["wa1"], p["wc1"]], axis=1)              # (I, 2H)
    z = jnp.zeros((H, H), jnp.float32)
    w2 = jnp.block([[p["wa2"], z], [z, p["wc2"]]])                   # (2H, 2H)
    bias = jnp.stack([
        jnp.concatenate([p["ba1"], p["bc1"]]),                       # row 0: b1
        jnp.concatenate([p["ba2"], p["bc2"]]),                       # row 1: b2
        jnp.concatenate([jnp.zeros((H,), jnp.float32), p["wcl"][:, 0]]),  # row 2: value head
        jnp.full((2 * H,), p["bcl"][0], jnp.float32),                # row 3: bcl
    ])                                                               # (4, 2H)
    return {"w1": w1, "w2": w2, "bias": bias}


# ----------------------------------------------------------------------------
# Pure-JAX reference (unfused) for correctness.
# ----------------------------------------------------------------------------
def reference_forward(x, p):
    ha = jnp.tanh(x @ p["wa1"] + p["ba1"])
    ha = jnp.tanh(ha @ p["wa2"] + p["ba2"])
    hc = jnp.tanh(x @ p["wc1"] + p["bc1"])
    hc = jnp.tanh(hc @ p["wc2"] + p["bc2"])
    value = hc @ p["wcl"] + p["bcl"]
    return value, ha


if __name__ == "__main__":
    batch = 8
    num_inputs = 16
    hidden_size = 64   # module default

    key = jax.random.PRNGKey(0)
    k_params, k_x = jax.random.split(key, 2)

    params = init_mlp_base_params(k_params, num_inputs, hidden_size)
    packed = pack_params(params, hidden_size)

    x = jax.random.normal(k_x, (batch, num_inputs), jnp.float32)
    rnn_hxs = jnp.zeros((batch, 1), jnp.float32)   # recurrent_hidden_state_size == 1
    masks = jnp.ones((batch, 1), jnp.float32)

    value, hidden_actor, rnn_hxs_out = mlp_base_forward(
        x, rnn_hxs, masks, packed, hidden_size=hidden_size)
    jax.block_until_ready((value, hidden_actor, rnn_hxs_out))

    ref_value, ref_actor = reference_forward(x, params)
    assert value.shape == (batch, 1)
    assert hidden_actor.shape == (batch, hidden_size)
    assert jnp.allclose(value, ref_value, atol=1e-5, rtol=1e-5)
    assert jnp.allclose(hidden_actor, ref_actor, atol=1e-5, rtol=1e-5)
    assert jnp.array_equal(rnn_hxs_out, rnn_hxs)

    print("KERNEL_OK")
</pallas_src>

<mosaic_0001>
module attributes {stable_mosaic.version = 11 : i64} {
  func.func @mlp_base_kernel(%arg0: i32, %arg1: memref<8x16xf32, #tpu.memory_space<vmem>>, %arg2: memref<16x128xf32, #tpu.memory_space<vmem>>, %arg3: memref<128x128xf32, #tpu.memory_space<vmem>>, %arg4: memref<4x128xf32, #tpu.memory_space<vmem>>, %arg5: memref<8x128xf32, #tpu.memory_space<vmem>>) attributes {dimension_semantics = [#tpu.dimension_semantics<parallel>], iteration_bounds = array<i64: 1>, scalar_prefetch = 0 : i64, scratch_operands = 0 : i64, tpu.core_type = #tpu.core_type<tc>, window_params = [{transform_indices = @transform_0, window_bounds = array<i64: 8, 16>}, {pipeline_mode = #tpu.pipeline_mode<synchronous>, transform_indices = @transform_1, window_bounds = array<i64: 16, 128>}, {pipeline_mode = #tpu.pipeline_mode<synchronous>, transform_indices = @transform_2, window_bounds = array<i64: 128, 128>}, {pipeline_mode = #tpu.pipeline_mode<synchronous>, transform_indices = @transform_3, window_bounds = array<i64: 4, 128>}, {transform_indices = @transform_4, window_bounds = array<i64: 8, 128>}]} {
    %c0 = arith.constant 0 : index
    %c0_0 = arith.constant 0 : index
    %0 = vector.load %arg1[%c0, %c0_0] : memref<8x16xf32, #tpu.memory_space<vmem>>, vector<8x16xf32>
    %c0_1 = arith.constant 0 : index
    %c0_2 = arith.constant 0 : index
    %1 = vector.load %arg4[%c0_1, %c0_2] : memref<4x128xf32, #tpu.memory_space<vmem>>, vector<1x128xf32>
    %c1 = arith.constant 1 : index
    %c0_3 = arith.constant 0 : index
    %2 = vector.load %arg4[%c1, %c0_3] : memref<4x128xf32, #tpu.memory_space<vmem>>, vector<1x128xf32>
    %c2 = arith.constant 2 : index
    %c0_4 = arith.constant 0 : index
    %3 = vector.load %arg4[%c2, %c0_4] : memref<4x128xf32, #tpu.memory_space<vmem>>, vector<1x128xf32>
    %c3 = arith.constant 3 : index
    %c0_5 = arith.constant 0 : index
    %4 = vector.load %arg4[%c3, %c0_5] : memref<4x128xf32, #tpu.memory_space<vmem>>, vector<1x1xf32>
    %c0_6 = arith.constant 0 : index
    %c0_7 = arith.constant 0 : index
    %5 = vector.load %arg2[%c0_6, %c0_7] : memref<16x128xf32, #tpu.memory_space<vmem>>, vector<16x128xf32>
    %cst = arith.constant dense<0.000000e+00> : vector<8x128xf32>
    %6 = tpu.matmul %0, %5, %cst {dimension_numbers = #tpu.dot_dimension_numbers<[1], [0], [0], [1], [0, 0, 1, 1], [], []>} : vector<8x16xf32>, vector<16x128xf32>, vector<8x128xf32> -> vector<8x128xf32>
    %7 = vector.broadcast %1 : vector<1x128xf32> to vector<8x128xf32>
    %8 = arith.addf %6, %7 : vector<8x128xf32>
    %9 = math.tanh %8 : vector<8x128xf32>
    %c0_8 = arith.constant 0 : index
    %c0_9 = arith.constant 0 : index
    %10 = vector.load %arg3[%c0_8, %c0_9] : memref<128x128xf32, #tpu.memory_space<vmem>>, vector<128x128xf32>
    %cst_10 = arith.constant dense<0.000000e+00> : vector<8x128xf32>
    %11 = tpu.matmul %9, %10, %cst_10 {dimension_numbers = #tpu.dot_dimension_numbers<[1], [0], [0], [1], [0, 0, 1, 1], [], []>} : vector<8x128xf32>, vector<128x128xf32>, vector<8x128xf32> -> vector<8x128xf32>
    %12 = vector.broadcast %2 : vector<1x128xf32> to vector<8x128xf32>
    %13 = arith.addf %11, %12 : vector<8x128xf32>
    %14 = math.tanh %13 : vector<8x128xf32>
    %15 = vector.broadcast %3 : vector<1x128xf32> to vector<8x128xf32>
    %16 = arith.mulf %14, %15 : vector<8x128xf32>
    %cst_11 = arith.constant dense<0.000000e+00> : vector<8xf32>
    %17 = vector.multi_reduction <add>, %16, %cst_11 [1] : vector<8x128xf32> to vector<8xf32>
    %18 = vector.shape_cast %17 : vector<8xf32> to vector<8x1xf32>
    %19 = vector.broadcast %4 : vector<1x1xf32> to vector<8x1xf32>
    %20 = arith.addf %18, %19 : vector<8x1xf32>
    %21 = tpu.iota {dimensions = array<i32: 1>} : vector<8x128xi32>
    %c64_i32 = arith.constant 64 : i32
    %22 = vector.broadcast %c64_i32 : i32 to vector<8x128xi32>
    %23 = arith.cmpi slt, %21, %22 : vector<8x128xi32>
    %24 = vector.shape_cast %20 : vector<8x1xf32> to vector<8x1xf32>
    %25 = vector.broadcast %24 : vector<8x1xf32> to vector<8x128xf32>
    %26 = arith.select %23, %14, %25 : vector<8x128xi1>, vector<8x128xf32>
    %c0_12 = arith.constant 0 : index
    %c0_13 = arith.constant 0 : index
    %27 = vector.load %arg5[%c0_12, %c0_13] : memref<8x128xf32, #tpu.memory_space<vmem>>, vector<8x128xf32>
    tpu.vector_store %arg5[%c0_12, %c0_13], %26 {strides = array<i32>} : memref<8x128xf32, #tpu.memory_space<vmem>>, vector<8x128xf32>,
    return
  }
  func.func @transform_0(%arg0: i32) -> (i32, i32) {
    %c0_i32 = arith.constant 0 : i32
    %c0_i32_0 = arith.constant 0 : i32
    return %arg0, %c0_i32 : i32, i32
  }
  func.func @transform_1(%arg0: i32) -> (i32, i32) {
    %c0_i32 = arith.constant 0 : i32
    %c0_i32_0 = arith.constant 0 : i32
    %c0_i32_1 = arith.constant 0 : i32
    return %c0_i32, %c0_i32_0 : i32, i32
  }
  func.func @transform_2(%arg0: i32) -> (i32, i32) {
    %c0_i32 = arith.constant 0 : i32
    %c0_i32_0 = arith.constant 0 : i32
    %c0_i32_1 = arith.constant 0 : i32
    return %c0_i32, %c0_i32_0 : i32, i32
  }
  func.func @transform_3(%arg0: i32) -> (i32, i32) {
    %c0_i32 = arith.constant 0 : i32
    %c0_i32_0 = arith.constant 0 : i32
    %c0_i32_1 = arith.constant 0 : i32
    return %c0_i32, %c0_i32_0 : i32, i32
  }
  func.func @transform_4(%arg0: i32) -> (i32, i32) {
    %c0_i32 = arith.constant 0 : i32
    %c0_i32_0 = arith.constant 0 : i32
    return %arg0, %c0_i32 : i32, i32
  }
}

</mosaic_0001>

<llo_original>
// kernel: tpu_custom_call.1
$region0: #{tpu_custom_call.1}
  #allocation0 [shape = 'u32[]', space=smem, size = 0x4, offset = 0x4, fixed_abs, tag = 'smem constant byte address 0x4 - core index']
  #allocation1 [shape = 'u32[72,128]{1,0:T(1,128)}', space=vmem, size = 0x9000, scoped, tag = 'internal scratch']
  %s0 = inlined_call_operand.hbm [shape: f32[8,16], index: 0, kind: input, shape index: {}]
  %s1 = inlined_call_operand.hbm [shape: f32[16,128], index: 1, kind: input, shape index: {}]
  %s2 = inlined_call_operand.hbm [shape: f32[128,128], index: 2, kind: input, shape index: {}]
  %s3 = inlined_call_operand.hbm [shape: f32[4,128], index: 3, kind: input, shape index: {}]
  %s4 = inlined_call_operand.hbm [shape: f32[8,128], index: 4, kind: output, shape index: {}]
  %s5 = sld [smem:[#allocation0]]
  $region42: #{tpu_custom_call.1} parent=0
    _
  %s7 = ssub.s32 1, %s5
  %s8 = scalar_select 0, %s7, %s5
  $region1: #{tpu_custom_call.1} parent=0
    #allocation2 [shape = 'u8[4096]{0}', space=vmem, size = 0x1000, scoped, tag = 'input window, operand 0, single buffered']
    #allocation3 [shape = 's32[1]{0}', space=sflag, size = 0x4, scoped, tag = 'scoped memory for tpu_custom_call.1']
    #allocation4 [shape = 's32[1]{0}', space=sflag, size = 0x4, scoped, tag = 'scoped memory for tpu_custom_call.1']
    #allocation5 [shape = 'u8[8192]{0}', space=vmem, size = 0x2000, scoped, tag = 'input window, operand 1, single buffered']
    #allocation6 [shape = 's32[1]{0}', space=sflag, size = 0x4, scoped, tag = 'scoped memory for tpu_custom_call.1']
    #allocation7 [shape = 'u8[65536]{0}', space=vmem, size = 0x10000, scoped, tag = 'input window, operand 2, single buffered']
    #allocation8 [shape = 'u8[2048]{0}', space=vmem, size = 0x800, scoped, tag = 'input window, operand 3, single buffered']
    #allocation9 [shape = 's32[1]{0}', space=sflag, size = 0x4, scoped, tag = 'scoped memory for tpu_custom_call.1']
    #allocation10 [shape = 'u8[4096]{0}', space=vmem, size = 0x1000, scoped, tag = 'output window, operand 0, single buffered']
    %9 = vsyncpa [#allocation3], 0
    %10 = vsyncpa [#allocation6], 0
    %11 = vsyncpa [#allocation9], 0
    %12 = vsyncpa [#allocation4], 0
    // Predicated region
    $region2: #{tpu_custom_call.1} parent=1 // pred_check
      _
    $region3: #{tpu_custom_call.1} parent=1 // pred_check_branch
      %14 = sbr.rel (0) target = $region5
    $region4: #{tpu_custom_call.1} parent=1 // pred_region
      %16 = vsyncadd [#allocation3], 0
      %s18 = sshll.u32 %s0, 4
      %s19 = int_to_ptr.hbm [resolvable:$true] %s18
      %s20 = sshll.u32 [#allocation2], 4
      %s21 = int_to_ptr.vmem [resolvable:$true] %s20
      %23 = dma.hbm_to_vmem [thread:$0]  %s19, 128, %s21, [#allocation3]
    $region5: #{tpu_custom_call.1} parent=1 // pred_fallthru
      _
    // Predicated region
    $region6: #{tpu_custom_call.1} parent=1 // pred_check
      _
    $region7: #{tpu_custom_call.1} parent=1 // pred_check_branch
      %25 = sbr.rel (0) target = $region9
    $region8: #{tpu_custom_call.1} parent=1 // pred_region
      %27 = vsyncadd [#allocation6], 0
      %s28 = sshll.u32 %s1, 4
      %s29 = int_to_ptr.hbm [resolvable:$true] %s28
      %s30 = sshll.u32 [#allocation5], 4
      %s31 = int_to_ptr.vmem [resolvable:$true] %s30
      %36 = dma.hbm_to_vmem [thread:$0]  %s29, 256, %s31, [#allocation6], 128, 128, 8
    $region9: #{tpu_custom_call.1} parent=1 // pred_fallthru
      _
    // Predicated region
    $region10: #{tpu_custom_call.1} parent=1 // pred_check
      _
    $region11: #{tpu_custom_call.1} parent=1 // pred_check_branch
      %38 = sbr.rel (0) target = $region13
    $region12: #{tpu_custom_call.1} parent=1 // pred_region
      %40 = vsyncadd [#allocation6], 0
      %s41 = sshll.u32 %s2, 4
      %s42 = int_to_ptr.hbm [resolvable:$true] %s41
      %s43 = sshll.u32 [#allocation7], 4
      %s44 = int_to_ptr.vmem [resolvable:$true] %s43
      %49 = dma.hbm_to_vmem [thread:$0]  %s42, 2048, %s44, [#allocation6], 128, 128, 8
    $region13: #{tpu_custom_call.1} parent=1 // pred_fallthru
      _
    // Predicated region
    $region14: #{tpu_custom_call.1} parent=1 // pred_check
      _
    $region15: #{tpu_custom_call.1} parent=1 // pred_check_branch
      %51 = sbr.rel (0) target = $region17
    $region16: #{tpu_custom_call.1} parent=1 // pred_region
      %53 = vsyncadd [#allocation9], 0
      %s55 = sshll.u32 %s3, 4
      %s56 = int_to_ptr.hbm [resolvable:$true] %s55
      %s57 = sshll.u32 [#allocation8], 4
      %s58 = int_to_ptr.vmem [resolvable:$true] %s57
      %60 = dma.hbm_to_vmem [thread:$0]  %s56, 64, %s58, [#allocation9]
    $region17: #{tpu_custom_call.1} parent=1 // pred_fallthru
      _
    // Predicated region
    $region18: #{tpu_custom_call.1} parent=1 // pred_check
      _
    $region19: #{tpu_custom_call.1} parent=1 // pred_check_branch
      %62 = sbr.rel (0) target = $region21
    $region20: #{tpu_custom_call.1} parent=1 // pred_region
      %64 = dma.done [#allocation3], 128
    $region21: #{tpu_custom_call.1} parent=1 // pred_fallthru
      _
    // Predicated region
    $region22: #{tpu_custom_call.1} parent=1 // pred_check
      _
    $region23: #{tpu_custom_call.1} parent=1 // pred_check_branch
      %66 = sbr.rel (0) target = $region25
    $region24: #{tpu_custom_call.1} parent=1 // pred_region
      %68 = dma.done [#allocation6], 256
    $region25: #{tpu_custom_call.1} parent=1 // pred_fallthru
      _
    // Predicated region
    $region26: #{tpu_custom_call.1} parent=1 // pred_check
      _
    $region27: #{tpu_custom_call.1} parent=1 // pred_check_branch
      %70 = sbr.rel (0) target = $region29
    $region28: #{tpu_custom_call.1} parent=1 // pred_region
      %72 = dma.done [#allocation6], 2048
    $region29: #{tpu_custom_call.1} parent=1 // pred_fallthru
      _
    // Predicated region
    $region30: #{tpu_custom_call.1} parent=1 // pred_check
      _
    $region31: #{tpu_custom_call.1} parent=1 // pred_check_branch
      %74 = sbr.rel (0) target = $region33
    $region32: #{tpu_custom_call.1} parent=1 // pred_region
      %76 = dma.done [#allocation9], 64
    $region33: #{tpu_custom_call.1} parent=1 // pred_fallthru
      _
    %v77 = vld [vmem:[#allocation2] sm:$0xff]
    %v78 = vld [vmem:[#allocation8] sm:$0x1]
    %v79 = vld [vmem:[#allocation8 + $0x1] sm:$0x1]
    %v80 = vld [vmem:[#allocation8 + $0x2] sm:$0x1]
    %v81 = vld [vmem:[#allocation8 + $0x3] sm:$0x1]
    %v82 = vld [vmem:[#allocation5] sm:$0xff]
    %v83 = vld [vmem:[#allocation5 + $0x8] sm:$0xff]
    %v84 = vperm.slane %v78, 0
    %vm85 = vcmask 130048
    %v87 = vsel %vm85, %v77, 0
    %89 = vmatpush.msra.mxu0 0.0
    %90 = vmatpush.msra.mxu0 0.0
    %91 = vmatpush.msra.mxu0 0.0
    %92 = vmatpush.msra.mxu0 0.0
    %93 = vmatpush.msra.mxu0 0.0
    %94 = vmatpush.msra.mxu0 0.0
    %95 = vmatpush.msra.mxu0 0.0
    %96 = vmatpush.msra.mxu0 0.0
    %97 = vmatpush.msra.mxu0 0.0
    %98 = vmatpush.msra.mxu0 0.0
    %99 = vmatpush.msra.mxu0 0.0
    %100 = vmatpush.msra.mxu0 0.0
    %101 = vmatpush.msra.mxu0 0.0
    %102 = vmatpush.msra.mxu0 0.0
    %103 = vmatpush.msra.mxu0 %v83
    %104 = vmatpush.msra.mxu0 %v82
    %105 = vmatmul.f32.gmra.mxu0 %v87
    %v106 = vpop.f32.mrf.mxu0
    %v107 = vadd.f32 %v84, %v106
    %108 = vdwg.mxu0
    %v109 = vtanh.pop %v107
    %v110 = vld [vmem:[#allocation7] sm:$0xff]
    %v111 = vld [vmem:[#allocation7 + $0x8] sm:$0xff]
    %v112 = vld [vmem:[#allocation7 + $0x10] sm:$0xff]
    %v113 = vld [vmem:[#allocation7 + $0x18] sm:$0xff]
    %v114 = vld [vmem:[#allocation7 + $0x20] sm:$0xff]
    %v115 = vld [vmem:[#allocation7 + $0x28] sm:$0xff]
    %v116 = vld [vmem:[#allocation7 + $0x30] sm:$0xff]
    %v117 = vld [vmem:[#allocation7 + $0x38] sm:$0xff]
    %v118 = vld [vmem:[#allocation7 + $0x40] sm:$0xff]
    %v119 = vld [vmem:[#allocation7 + $0x48] sm:$0xff]
    %v120 = vld [vmem:[#allocation7 + $0x50] sm:$0xff]
    %v121 = vld [vmem:[#allocation7 + $0x58] sm:$0xff]
    %v122 = vld [vmem:[#allocation7 + $0x60] sm:$0xff]
    %v123 = vld [vmem:[#allocation7 + $0x68] sm:$0xff]
    %v124 = vld [vmem:[#allocation7 + $0x70] sm:$0xff]
    %v125 = vld [vmem:[#allocation7 + $0x78] sm:$0xff]
    %v126 = vperm.slane %v79, 0
    %127 = vmatpush.msra.mxu0 %v125
    %128 = vmatpush.msra.mxu0 %v124
    %129 = vmatpush.msra.mxu0 %v123
    %130 = vmatpush.msra.mxu0 %v122
    %131 = vmatpush.msra.mxu0 %v121
    %132 = vmatpush.msra.mxu0 %v120
    %133 = vmatpush.msra.mxu0 %v119
    %134 = vmatpush.msra.mxu0 %v118
    %135 = vmatpush.msra.mxu0 %v117
    %136 = vmatpush.msra.mxu0 %v116
    %137 = vmatpush.msra.mxu0 %v115
    %138 = vmatpush.msra.mxu0 %v114
    %139 = vmatpush.msra.mxu0 %v113
    %140 = vmatpush.msra.mxu0 %v112
    %141 = vmatpush.msra.mxu0 %v111
    %142 = vmatpush.msra.mxu0 %v110
    %143 = vmatmul.f32.gmra.mxu0 %v109
    %v144 = vpop.f32.mrf.mxu0
    %v145 = vadd.f32 %v126, %v144
    %146 = vdwg.mxu0
    %v147 = vtanh.pop %v145
    %v148 = vperm.slane %v80, 0
    %v149 = vmul.f32 %v147, %v148
    %150 = vadd.xlane.f32.xlu0 %v149
    %v151 = vpop.xlane.xlu0 %150
    %v152 = vperm.slane %v81, 0
    %v153 = vadd.f32 %v151, %v152
    %v154 = vlaneseq
    %v155 = vand.u32 %v154, 127
    %vm156 = vcmp.lt.s32.totalorder %v155, 64
    %158 = vset.pattern.permute.xlu0 0
    %159 = vperm.xlu0 %158, %v153
    %v160 = vpop.permute.xlu0 %159
    %v162 = vsel %vm156, %v147, %v160
    %163 = vst [vmem:[#allocation10] sm:$0xff] %v162
    // Predicated region
    $region34: #{tpu_custom_call.1} parent=1 // pred_check
      _
    $region35: #{tpu_custom_call.1} parent=1 // pred_check_branch
      %165 = sbr.rel (0) target = $region37
    $region36: #{tpu_custom_call.1} parent=1 // pred_region
      %167 = vsyncadd [#allocation4], 0
      %s169 = sshll.u32 [#allocation10], 4
      %s170 = int_to_ptr.vmem [resolvable:$true] %s169
      %s171 = sshll.u32 %s4, 4
      %s172 = int_to_ptr.hbm [resolvable:$true] %s171
      %174 = dma.vmem_to_hbm [thread:$0]  %s170, 128, %s172, [#allocation4]
    $region37: #{tpu_custom_call.1} parent=1 // pred_fallthru
      _
    // Predicated region
    $region38: #{tpu_custom_call.1} parent=1 // pred_check
      _
    $region39: #{tpu_custom_call.1} parent=1 // pred_check_branch
      %176 = sbr.rel (0) target = $region41
    $region40: #{tpu_custom_call.1} parent=1 // pred_region
      %178 = dma.done [#allocation4], 128
    $region41: #{tpu_custom_call.1} parent=1 // pred_fallthru
      _
    %179 = vsyncpa [#allocation3], 1
    %180 = vsyncpa [#allocation6], 1
    %181 = vsyncpa [#allocation9], 1
    %182 = vsyncpa [#allocation4], 1

</llo_original>
